<compile_context>
chip_gen: v5e
topology: v5e:2x2
jax: 0.10.0
libtpu: 0.0.40
codegen_flags: <defaults>
</compile_context>

<pallas_src>
import jax
import jax.numpy as jnp
from jax.experimental import pallas as pl
from jax.experimental.pallas import tpu as pltpu

_HIGHEST = jax.lax.Precision.HIGHEST


def gmu_kernel(x1t_ref, x2t_ref, w1_ref, w2_ref, wz1_ref, wz2_ref, ot_ref):
    # h1t = tanh(W1 @ x1t): (O, D1) @ (D1, tm) -> (O, tm), lane-dense.
    h1 = jnp.tanh(jnp.dot(w1_ref[...], x1t_ref[...],
                          preferred_element_type=jnp.float32,
                          precision=_HIGHEST))
    h2 = jnp.tanh(jnp.dot(w2_ref[...], x2t_ref[...],
                          preferred_element_type=jnp.float32,
                          precision=_HIGHEST))
    # z = sigmoid(cat(h1, h2) @ wz^T) == sigmoid(sum_O(h1*wz1 + h2*wz2)).
    # VPU multiply + XLU sublane reduce; sigmoid over a (1, tm) dense row.
    z_logit = jnp.sum(h1 * wz1_ref[...] + h2 * wz2_ref[...],
                      axis=0, keepdims=True)
    z = jax.nn.sigmoid(z_logit)                       # (1, tm), f32
    # o = z*h1 + (1-z)*h2  ==  h2 + z*(h1 - h2)
    ot_ref[...] = (h2 + z * (h1 - h2)).astype(ot_ref.dtype)


def _choose_batch_tile(B, tm_max):
    """Lane-aligned batch tile (on the lane axis of the transposed layout)."""
    LANE = 128
    Bl = pl.cdiv(B, LANE) * LANE                    # lane-pad the batch
    tm_max = max(LANE, (tm_max // LANE) * LANE)
    if Bl <= tm_max:
        return Bl, Bl                               # one big tile, one step
    n = pl.cdiv(Bl, tm_max)
    if n % 2:                                       # even step count balances
        n += 1                                      # v7x's two TensorCores
    tm = pl.cdiv(pl.cdiv(Bl, n), LANE) * LANE
    Bp = pl.cdiv(Bl, tm) * tm
    return tm, Bp


def _vmem_block_bytes(block_shape, dtype):
    """VMEM footprint of one buffer of a block, (sublane,128)-lane padded."""
    item = jnp.dtype(dtype).itemsize
    sub = 8 * (4 // item)                           # f32 -> 8 rows, bf16 -> 16
    r = pl.cdiv(block_shape[0], sub) * sub
    c = pl.cdiv(block_shape[1], 128) * 128
    return r * c * item


def gated_multimodal_layer(x1, x2, w1, w2, wz, *, tm_max=2048, use_bf16=False):
    """x1: (B, D1), x2: (B, D2); torch-layout weights w1: (O, D1), w2: (O, D2),
    wz: (1, 2*O).  Returns (B, O) float32."""
    B, D1 = x1.shape
    B2, D2 = x2.shape
    assert B2 == B, "x1 / x2 batch mismatch"
    O = w1.shape[0]

    # Batch-on-lanes: transpose inputs so batch sits on the 128-lane axis.
    x1t = x1.T                                      # (D1, B)
    x2t = x2.T                                      # (D2, B)

    tm, Bp = _choose_batch_tile(B, tm_max)
    if Bp != B:
        pad = Bp - B
        x1t = jnp.pad(x1t, ((0, 0), (0, pad)))      # tanh(0)=0, sliced off later
        x2t = jnp.pad(x2t, ((0, 0), (0, pad)))

    if use_bf16:
        in_dtype = jnp.bfloat16                     # halves x1/x2 HBM traffic
        x1t = x1t.astype(in_dtype)
        x2t = x2t.astype(in_dtype)
        w1c = w1.astype(in_dtype)
        w2c = w2.astype(in_dtype)
    else:
        in_dtype = jnp.float32
        w1c, w2c = w1, w2

    # Gate weights as (O, 1) columns; kept f32 (elementwise math stays f32).
    wz1_col = wz[:, :O].T.astype(jnp.float32)       # (O, 1)
    wz2_col = wz[:, O:].T.astype(jnp.float32)       # (O, 1)

    grid = (Bp // tm,)

    # VMEM budget: lane/sublane-padded block bytes x 2 buffers + 4 MiB headroom.
    in_blocks = [((D1, tm), in_dtype), ((D2, tm), in_dtype),
                 ((O, D1), in_dtype), ((O, D2), in_dtype),
                 ((O, 1), jnp.float32), ((O, 1), jnp.float32)]
    out_blocks = [((O, tm), jnp.float32)]
    buffered = sum(2 * _vmem_block_bytes(s, d) for s, d in in_blocks + out_blocks)
    vmem_limit = int(min(max(buffered + (4 << 20), 8 << 20), 64 << 20))

    out_t = pl.pallas_call(
        gmu_kernel,
        out_shape=jax.ShapeDtypeStruct((O, Bp), jnp.float32),
        grid=grid,
        in_specs=[
            pl.BlockSpec((D1, tm), lambda i: (0, i)),   # x1^T batch tile
            pl.BlockSpec((D2, tm), lambda i: (0, i)),   # x2^T batch tile
            pl.BlockSpec((O, D1), lambda i: (0, 0)),    # W1 (VMEM-resident)
            pl.BlockSpec((O, D2), lambda i: (0, 0)),    # W2 (VMEM-resident)
            pl.BlockSpec((O, 1), lambda i: (0, 0)),     # gate weights, h1 half
            pl.BlockSpec((O, 1), lambda i: (0, 0)),     # gate weights, h2 half
        ],
        out_specs=pl.BlockSpec((O, tm), lambda i: (0, i)),   # lane-dense output
        compiler_params=pltpu.CompilerParams(
            dimension_semantics=("parallel",),
            vmem_limit_bytes=vmem_limit),
    )(x1t, x2t, w1c, w2c, wz1_col, wz2_col)

    out = out_t.T                                    # (Bp, O)
    return out[:B] if Bp != B else out


def reference_gmu(x1, x2, w1, w2, wz):
    # Pure-JAX reference matching the PyTorch module (weights in torch layout).
    # precision=HIGHEST so the reference is true-f32, like PyTorch on CPU/GPU.
    h1 = jnp.tanh(jnp.dot(x1, w1.T, precision=_HIGHEST))
    h2 = jnp.tanh(jnp.dot(x2, w2.T, precision=_HIGHEST))
    h = jnp.concatenate([h1, h2], axis=-1)
    z = jax.nn.sigmoid(jnp.dot(h, wz.T, precision=_HIGHEST))
    return z * h1 + (1.0 - z) * h2


if __name__ == "__main__":
    # Small shapes consistent with the module: two feature vectors per example.
    B = 19          # deliberately NOT a multiple of 8/128 to exercise padding
    D1 = 32         # size_in1
    D2 = 48         # size_in2
    O = 16          # size_out (module default)

    key = jax.random.PRNGKey(0)
    k1, k2, kw1, kw2, kwz = jax.random.split(key, 5)

    x1 = jax.random.normal(k1, (B, D1), dtype=jnp.float32)
    x2 = jax.random.normal(k2, (B, D2), dtype=jnp.float32)

    # Deterministic parameter init (PyTorch Linear layout: (out, in)).
    w1 = jax.random.uniform(kw1, (O, D1), jnp.float32, -1.0 / D1**0.5, 1.0 / D1**0.5)
    w2 = jax.random.uniform(kw2, (O, D2), jnp.float32, -1.0 / D2**0.5, 1.0 / D2**0.5)
    wz = jax.random.uniform(kwz, (1, 2 * O), jnp.float32,
                            -1.0 / (2 * O)**0.5, 1.0 / (2 * O)**0.5)

    ref = reference_gmu(x1, x2, w1, w2, wz)

    # f32 path: bit-faithful to the module (HIGHEST-precision matmuls).
    out_f32 = jax.block_until_ready(
        gated_multimodal_layer(x1, x2, w1, w2, wz, use_bf16=False))
    assert out_f32.shape == (B, O)
    assert jnp.allclose(out_f32, ref, atol=1e-4, rtol=1e-4), "f32 mismatch vs reference"

    # bf16 input/weight path: halved input HBM traffic, f32 accumulation.
    out_bf16 = jax.block_until_ready(
        gated_multimodal_layer(x1, x2, w1, w2, wz, use_bf16=True))
    assert out_bf16.shape == (B, O)
    assert jnp.allclose(out_bf16, ref, atol=5e-2, rtol=5e-2), "bf16 mismatch vs reference"

    print("KERNEL_OK")
</pallas_src>

<mosaic_0001>
module attributes {stable_mosaic.version = 11 : i64} {
  func.func @gmu_kernel(%arg0: i32, %arg1: memref<32x128xf32, #tpu.memory_space<vmem>>, %arg2: memref<48x128xf32, #tpu.memory_space<vmem>>, %arg3: memref<16x32xf32, #tpu.memory_space<vmem>>, %arg4: memref<16x48xf32, #tpu.memory_space<vmem>>, %arg5: memref<16x1xf32, #tpu.memory_space<vmem>>, %arg6: memref<16x1xf32, #tpu.memory_space<vmem>>, %arg7: memref<16x128xf32, #tpu.memory_space<vmem>>) attributes {dimension_semantics = [#tpu.dimension_semantics<parallel>], iteration_bounds = array<i64: 1>, scalar_prefetch = 0 : i64, scratch_operands = 0 : i64, tpu.core_type = #tpu.core_type<tc>, window_params = [{transform_indices = @transform_0, window_bounds = array<i64: 32, 128>}, {transform_indices = @transform_1, window_bounds = array<i64: 48, 128>}, {pipeline_mode = #tpu.pipeline_mode<synchronous>, transform_indices = @transform_2, window_bounds = array<i64: 16, 32>}, {pipeline_mode = #tpu.pipeline_mode<synchronous>, transform_indices = @transform_3, window_bounds = array<i64: 16, 48>}, {pipeline_mode = #tpu.pipeline_mode<synchronous>, transform_indices = @transform_4, window_bounds = array<i64: 16, 1>}, {pipeline_mode = #tpu.pipeline_mode<synchronous>, transform_indices = @transform_5, window_bounds = array<i64: 16, 1>}, {transform_indices = @transform_6, window_bounds = array<i64: 16, 128>}]} {
    %c0 = arith.constant 0 : index
    %c0_0 = arith.constant 0 : index
    %0 = vector.load %arg3[%c0, %c0_0] : memref<16x32xf32, #tpu.memory_space<vmem>>, vector<16x32xf32>
    %c0_1 = arith.constant 0 : index
    %c0_2 = arith.constant 0 : index
    %1 = vector.load %arg1[%c0_1, %c0_2] : memref<32x128xf32, #tpu.memory_space<vmem>>, vector<32x128xf32>
    %cst = arith.constant dense<0.000000e+00> : vector<16x128xf32>
    %2 = tpu.matmul %0, %1, %cst {dimension_numbers = #tpu.dot_dimension_numbers<[1], [0], [0], [1], [0, 0, 1, 1], [], []>, precision = #tpu.contract_precision<fp32>} : vector<16x32xf32>, vector<32x128xf32>, vector<16x128xf32> -> vector<16x128xf32>
    %3 = math.tanh %2 : vector<16x128xf32>
    %c0_3 = arith.constant 0 : index
    %c0_4 = arith.constant 0 : index
    %4 = vector.load %arg4[%c0_3, %c0_4] : memref<16x48xf32, #tpu.memory_space<vmem>>, vector<16x48xf32>
    %c0_5 = arith.constant 0 : index
    %c0_6 = arith.constant 0 : index
    %5 = vector.load %arg2[%c0_5, %c0_6] : memref<48x128xf32, #tpu.memory_space<vmem>>, vector<48x128xf32>
    %cst_7 = arith.constant dense<0.000000e+00> : vector<16x128xf32>
    %6 = tpu.matmul %4, %5, %cst_7 {dimension_numbers = #tpu.dot_dimension_numbers<[1], [0], [0], [1], [0, 0, 1, 1], [], []>, precision = #tpu.contract_precision<fp32>} : vector<16x48xf32>, vector<48x128xf32>, vector<16x128xf32> -> vector<16x128xf32>
    %7 = math.tanh %6 : vector<16x128xf32>
    %c0_8 = arith.constant 0 : index
    %c0_9 = arith.constant 0 : index
    %8 = vector.load %arg5[%c0_8, %c0_9] : memref<16x1xf32, #tpu.memory_space<vmem>>, vector<16x1xf32>
    %9 = vector.broadcast %8 : vector<16x1xf32> to vector<16x128xf32>
    %10 = arith.mulf %3, %9 : vector<16x128xf32>
    %c0_10 = arith.constant 0 : index
    %c0_11 = arith.constant 0 : index
    %11 = vector.load %arg6[%c0_10, %c0_11] : memref<16x1xf32, #tpu.memory_space<vmem>>, vector<16x1xf32>
    %12 = vector.broadcast %11 : vector<16x1xf32> to vector<16x128xf32>
    %13 = arith.mulf %7, %12 : vector<16x128xf32>
    %14 = arith.addf %10, %13 : vector<16x128xf32>
    %cst_12 = arith.constant dense<0.000000e+00> : vector<128xf32>
    %15 = vector.multi_reduction <add>, %14, %cst_12 [0] : vector<16x128xf32> to vector<128xf32>
    %16 = vector.shape_cast %15 : vector<128xf32> to vector<1x128xf32>
    %17 = arith.negf %16 : vector<1x128xf32>
    %18 = math.exp %17 : vector<1x128xf32>
    %cst_13 = arith.constant 1.000000e+00 : f32
    %19 = vector.broadcast %cst_13 : f32 to vector<1x128xf32>
    %20 = arith.addf %19, %18 : vector<1x128xf32>
    %21 = arith.divf %19, %20 : vector<1x128xf32>
    %22 = arith.subf %3, %7 : vector<16x128xf32>
    %23 = vector.broadcast %21 : vector<1x128xf32> to vector<16x128xf32>
    %24 = arith.mulf %23, %22 : vector<16x128xf32>
    %25 = arith.addf %7, %24 : vector<16x128xf32>
    %c0_14 = arith.constant 0 : index
    %c0_15 = arith.constant 0 : index
    %26 = vector.load %arg7[%c0_14, %c0_15] : memref<16x128xf32, #tpu.memory_space<vmem>>, vector<16x128xf32>
    tpu.vector_store %arg7[%c0_14, %c0_15], %25 {strides = array<i32>} : memref<16x128xf32, #tpu.memory_space<vmem>>, vector<16x128xf32>,
    return
  }
  func.func @transform_0(%arg0: i32) -> (i32, i32) {
    %c0_i32 = arith.constant 0 : i32
    %c0_i32_0 = arith.constant 0 : i32
    return %c0_i32, %arg0 : i32, i32
  }
  func.func @transform_1(%arg0: i32) -> (i32, i32) {
    %c0_i32 = arith.constant 0 : i32
    %c0_i32_0 = arith.constant 0 : i32
    return %c0_i32, %arg0 : i32, i32
  }
  func.func @transform_2(%arg0: i32) -> (i32, i32) {
    %c0_i32 = arith.constant 0 : i32
    %c0_i32_0 = arith.constant 0 : i32
    %c0_i32_1 = arith.constant 0 : i32
    return %c0_i32, %c0_i32_0 : i32, i32
  }
  func.func @transform_3(%arg0: i32) -> (i32, i32) {
    %c0_i32 = arith.constant 0 : i32
    %c0_i32_0 = arith.constant 0 : i32
    %c0_i32_1 = arith.constant 0 : i32
    return %c0_i32, %c0_i32_0 : i32, i32
  }
  func.func @transform_4(%arg0: i32) -> (i32, i32) {
    %c0_i32 = arith.constant 0 : i32
    %c0_i32_0 = arith.constant 0 : i32
    %c0_i32_1 = arith.constant 0 : i32
    return %c0_i32, %c0_i32_0 : i32, i32
  }
  func.func @transform_5(%arg0: i32) -> (i32, i32) {
    %c0_i32 = arith.constant 0 : i32
    %c0_i32_0 = arith.constant 0 : i32
    %c0_i32_1 = arith.constant 0 : i32
    return %c0_i32, %c0_i32_0 : i32, i32
  }
  func.func @transform_6(%arg0: i32) -> (i32, i32) {
    %c0_i32 = arith.constant 0 : i32
    %c0_i32_0 = arith.constant 0 : i32
    return %c0_i32, %arg0 : i32, i32
  }
}

</mosaic_0001>

<llo_original>
// kernel: tpu_custom_call.1
$region0: #{tpu_custom_call.1}
  #allocation0 [shape = 'u32[]', space=smem, size = 0x4, offset = 0x4, fixed_abs, tag = 'smem constant byte address 0x4 - core index']
  #allocation1 [shape = 'u32[72,128]{1,0:T(1,128)}', space=vmem, size = 0x9000, scoped, tag = 'internal scratch']
  %s0 = inlined_call_operand.vmem [shape: f32[32,128], index: 0, kind: input, shape index: {}]
  %s1 = inlined_call_operand.hbm [shape: f32[48,128], index: 1, kind: input, shape index: {}]
  %s2 = inlined_call_operand.hbm [shape: f32[16,32], index: 2, kind: input, shape index: {}]
  %s3 = inlined_call_operand.hbm [shape: f32[16,48], index: 3, kind: input, shape index: {}]
  %s4 = inlined_call_operand.vmem [shape: f32[16,1], index: 4, kind: input, shape index: {}]
  %s5 = inlined_call_operand.vmem [shape: f32[16,1], index: 5, kind: input, shape index: {}]
  %s6 = inlined_call_operand.hbm [shape: f32[16,128], index: 6, kind: output, shape index: {}]
  %s7 = sld [smem:[#allocation0]]
  $region46: #{tpu_custom_call.1} parent=0
    _
  %s9 = ssub.s32 1, %s7
  %s10 = scalar_select 0, %s9, %s7
  $region1: #{tpu_custom_call.1} parent=0
    #allocation2 [shape = 'u8[24576]{0}', space=vmem, size = 0x6000, scoped, tag = 'input window, operand 1, single buffered']
    #allocation3 [shape = 's32[1]{0}', space=sflag, size = 0x4, scoped, tag = 'scoped memory for tpu_custom_call.1']
    #allocation4 [shape = 's32[1]{0}', space=sflag, size = 0x4, scoped, tag = 'scoped memory for tpu_custom_call.1']
    #allocation5 [shape = 'u8[8192]{0}', space=vmem, size = 0x2000, scoped, tag = 'input window, operand 2, single buffered']
    #allocation6 [shape = 's32[1]{0}', space=sflag, size = 0x4, scoped, tag = 'scoped memory for tpu_custom_call.1']
    #allocation7 [shape = 'u8[8192]{0}', space=vmem, size = 0x2000, scoped, tag = 'input window, operand 3, single buffered']
    #allocation8 [shape = 'u8[8192]{0}', space=vmem, size = 0x2000, scoped, tag = 'output window, operand 0, single buffered']
    %11 = vsyncpa [#allocation3], 0
    %12 = vsyncpa [#allocation6], 0
    %13 = vsyncpa [#allocation4], 0
    // Predicated region
    $region2: #{tpu_custom_call.1} parent=1 // pred_check
      _
    $region3: #{tpu_custom_call.1} parent=1 // pred_check_branch
      %15 = sbr.rel (0) target = $region5
    $region4: #{tpu_custom_call.1} parent=1 // pred_region
      _
    $region5: #{tpu_custom_call.1} parent=1 // pred_fallthru
      _
    // Predicated region
    $region6: #{tpu_custom_call.1} parent=1 // pred_check
      _
    $region7: #{tpu_custom_call.1} parent=1 // pred_check_branch
      %17 = sbr.rel (0) target = $region9
    $region8: #{tpu_custom_call.1} parent=1 // pred_region
      %19 = vsyncadd [#allocation3], 0
      %s20 = sshll.u32 %s1, 4
      %s21 = int_to_ptr.hbm [resolvable:$true] %s20
      %s22 = sshll.u32 [#allocation2], 4
      %s23 = int_to_ptr.vmem [resolvable:$true] %s22
      %28 = dma.hbm_to_vmem [thread:$0]  %s21, 768, %s23, [#allocation3], 128, 128, 8
    $region9: #{tpu_custom_call.1} parent=1 // pred_fallthru
      _
    // Predicated region
    $region10: #{tpu_custom_call.1} parent=1 // pred_check
      _
    $region11: #{tpu_custom_call.1} parent=1 // pred_check_branch
      %30 = sbr.rel (0) target = $region13
    $region12: #{tpu_custom_call.1} parent=1 // pred_region
      %32 = vsyncadd [#allocation6], 0
      %s33 = sshll.u32 %s2, 4
      %s34 = int_to_ptr.hbm [resolvable:$true] %s33
      %s35 = sshll.u32 [#allocation5], 4
      %s36 = int_to_ptr.vmem [resolvable:$true] %s35
      %41 = dma.hbm_to_vmem [thread:$0]  %s34, 256, %s36, [#allocation6], 128, 128, 8
    $region13: #{tpu_custom_call.1} parent=1 // pred_fallthru
      _
    // Predicated region
    $region14: #{tpu_custom_call.1} parent=1 // pred_check
      _
    $region15: #{tpu_custom_call.1} parent=1 // pred_check_branch
      %43 = sbr.rel (0) target = $region17
    $region16: #{tpu_custom_call.1} parent=1 // pred_region
      %45 = vsyncadd [#allocation6], 0
      %s46 = sshll.u32 %s3, 4
      %s47 = int_to_ptr.hbm [resolvable:$true] %s46
      %s48 = sshll.u32 [#allocation7], 4
      %s49 = int_to_ptr.vmem [resolvable:$true] %s48
      %54 = dma.hbm_to_vmem [thread:$0]  %s47, 256, %s49, [#allocation6], 128, 128, 8
    $region17: #{tpu_custom_call.1} parent=1 // pred_fallthru
      _
    // Predicated region
    $region18: #{tpu_custom_call.1} parent=1 // pred_check
      _
    $region19: #{tpu_custom_call.1} parent=1 // pred_check_branch
      %56 = sbr.rel (0) target = $region21
    $region20: #{tpu_custom_call.1} parent=1 // pred_region
      _
    $region21: #{tpu_custom_call.1} parent=1 // pred_fallthru
      _
    // Predicated region
    $region22: #{tpu_custom_call.1} parent=1 // pred_check
      _
    $region23: #{tpu_custom_call.1} parent=1 // pred_check_branch
      %58 = sbr.rel (0) target = $region25
    $region24: #{tpu_custom_call.1} parent=1 // pred_region
      _
    $region25: #{tpu_custom_call.1} parent=1 // pred_fallthru
      _
    // Predicated region
    $region26: #{tpu_custom_call.1} parent=1 // pred_check
      _
    $region27: #{tpu_custom_call.1} parent=1 // pred_check_branch
      %60 = sbr.rel (0) target = $region29
    $region28: #{tpu_custom_call.1} parent=1 // pred_region
      %62 = dma.done [#allocation3], 768
    $region29: #{tpu_custom_call.1} parent=1 // pred_fallthru
      _
    // Predicated region
    $region30: #{tpu_custom_call.1} parent=1 // pred_check
      _
    $region31: #{tpu_custom_call.1} parent=1 // pred_check_branch
      %64 = sbr.rel (0) target = $region33
    $region32: #{tpu_custom_call.1} parent=1 // pred_region
      %66 = dma.done [#allocation6], 256
    $region33: #{tpu_custom_call.1} parent=1 // pred_fallthru
      _
    // Predicated region
    $region34: #{tpu_custom_call.1} parent=1 // pred_check
      _
    $region35: #{tpu_custom_call.1} parent=1 // pred_check_branch
      %68 = sbr.rel (0) target = $region37
    $region36: #{tpu_custom_call.1} parent=1 // pred_region
      %70 = dma.done [#allocation6], 256
    $region37: #{tpu_custom_call.1} parent=1 // pred_fallthru
      _
    %v71 = vld [vmem:[#allocation5] sm:$0xff]
    %v72 = vld [vmem:[#allocation5 + $0x8] sm:$0xff]
    %v73 = vld [vmem:[%s0] sm:$0xff]
    %v74 = vld [vmem:[%s0 + $0x8] sm:$0xff]
    %v75 = vld [vmem:[%s0 + $0x10] sm:$0xff]
    %v76 = vld [vmem:[%s0 + $0x18] sm:$0xff]
    %vm77 = vcmask 261120
    %v79 = vsel %vm77, %v71, 0
    %v82 = vsel %vm77, %v72, 0
    %84 = vmatpush.msra.mxu0 0.0
    %85 = vmatpush.msra.mxu0 0.0
    %86 = vmatpush.msra.mxu0 0.0
    %87 = vmatpush.msra.mxu0 0.0
    %88 = vmatpush.msra.mxu0 0.0
    %89 = vmatpush.msra.mxu0 0.0
    %90 = vmatpush.msra.mxu0 0.0
    %91 = vmatpush.msra.mxu0 0.0
    %92 = vmatpush.msra.mxu0 0.0
    %93 = vmatpush.msra.mxu0 0.0
    %94 = vmatpush.msra.mxu0 0.0
    %95 = vmatpush.msra.mxu0 0.0
    %v96 = vand.u32 %v76, 4294901760
    %97 = vmatpush.msra.mxu0 %v96
    %v98 = vand.u32 %v75, 4294901760
    %99 = vmatpush.msra.mxu0 %v98
    %v100 = vand.u32 %v74, 4294901760
    %101 = vmatpush.msra.mxu0 %v100
    %v102 = vand.u32 %v73, 4294901760
    %103 = vmatpush.msra.mxu0 %v102
    %v104 = vand.u32 %v79, 4294901760
    %v105 = vsub.f32 %v79, %v104
    %v106 = vand.u32 %v105, 4294901760
    %v107 = vsub.f32 %v105, %v106
    %v108 = vand.u32 %v107, 4294901760
    %109 = vmatmul.f32.gmra.mxu0 %v108
    %v110 = vpop.f32.mrf.mxu0
    %v111 = vadd.f32 0.0, %v110
    %v112 = vand.u32 %v82, 4294901760
    %v113 = vsub.f32 %v82, %v112
    %v114 = vand.u32 %v113, 4294901760
    %v115 = vsub.f32 %v113, %v114
    %v116 = vand.u32 %v115, 4294901760
    %117 = vmatmul.f32.gmra.mxu0 %v116
    %v118 = vpop.f32.mrf.mxu0
    %v119 = vadd.f32 0.0, %v118
    %120 = vdwg.mxu0
    %121 = vmatpush.msra.mxu0 0.0
    %122 = vmatpush.msra.mxu0 0.0
    %123 = vmatpush.msra.mxu0 0.0
    %124 = vmatpush.msra.mxu0 0.0
    %125 = vmatpush.msra.mxu0 0.0
    %126 = vmatpush.msra.mxu0 0.0
    %127 = vmatpush.msra.mxu0 0.0
    %128 = vmatpush.msra.mxu0 0.0
    %129 = vmatpush.msra.mxu0 0.0
    %130 = vmatpush.msra.mxu0 0.0
    %131 = vmatpush.msra.mxu0 0.0
    %132 = vmatpush.msra.mxu0 0.0
    %v133 = vand.u32 %v76, 4294901760
    %v134 = vsub.f32 %v76, %v133
    %v135 = vand.u32 %v134, 4294901760
    %v136 = vsub.f32 %v134, %v135
    %v137 = vand.u32 %v136, 4294901760
    %138 = vmatpush.msra.mxu0 %v137
    %v139 = vand.u32 %v75, 4294901760
    %v140 = vsub.f32 %v75, %v139
    %v141 = vand.u32 %v140, 4294901760
    %v142 = vsub.f32 %v140, %v141
    %v143 = vand.u32 %v142, 4294901760
    %144 = vmatpush.msra.mxu0 %v143
    %v145 = vand.u32 %v74, 4294901760
    %v146 = vsub.f32 %v74, %v145
    %v147 = vand.u32 %v146, 4294901760
    %v148 = vsub.f32 %v146, %v147
    %v149 = vand.u32 %v148, 4294901760
    %150 = vmatpush.msra.mxu0 %v149
    %v151 = vand.u32 %v73, 4294901760
    %v152 = vsub.f32 %v73, %v151
    %v153 = vand.u32 %v152, 4294901760
    %v154 = vsub.f32 %v152, %v153
    %v155 = vand.u32 %v154, 4294901760
    %156 = vmatpush.msra.mxu0 %v155
    %v157 = vand.u32 %v79, 4294901760
    %158 = vmatmul.f32.gmra.mxu0 %v157
    %v159 = vpop.f32.mrf.mxu0
    %v160 = vadd.f32 %v111, %v159
    %v161 = vand.u32 %v82, 4294901760
    %162 = vmatmul.f32.gmra.mxu0 %v161
    %v163 = vpop.f32.mrf.mxu0
    %v164 = vadd.f32 %v119, %v163
    %165 = vdwg.mxu0
    %166 = vmatpush.msra.mxu0 0.0
    %167 = vmatpush.msra.mxu0 0.0
    %168 = vmatpush.msra.mxu0 0.0
    %169 = vmatpush.msra.mxu0 0.0
    %170 = vmatpush.msra.mxu0 0.0
    %171 = vmatpush.msra.mxu0 0.0
    %172 = vmatpush.msra.mxu0 0.0
    %173 = vmatpush.msra.mxu0 0.0
    %174 = vmatpush.msra.mxu0 0.0
    %175 = vmatpush.msra.mxu0 0.0
    %176 = vmatpush.msra.mxu0 0.0
    %177 = vmatpush.msra.mxu0 0.0
    %v178 = vand.u32 %v76, 4294901760
    %v179 = vsub.f32 %v76, %v178
    %180 = vmatpush.msra.mxu0 %v179
    %v181 = vand.u32 %v75, 4294901760
    %v182 = vsub.f32 %v75, %v181
    %183 = vmatpush.msra.mxu0 %v182
    %v184 = vand.u32 %v74, 4294901760
    %v185 = vsub.f32 %v74, %v184
    %186 = vmatpush.msra.mxu0 %v185
    %v187 = vand.u32 %v73, 4294901760
    %v188 = vsub.f32 %v73, %v187
    %189 = vmatpush.msra.mxu0 %v188
    %v190 = vand.u32 %v79, 4294901760
    %v191 = vsub.f32 %v79, %v190
    %192 = vmatmul.f32.gmra.mxu0 %v191
    %v193 = vpop.f32.mrf.mxu0
    %v194 = vadd.f32 %v160, %v193
    %v195 = vand.u32 %v82, 4294901760
    %v196 = vsub.f32 %v82, %v195
    %197 = vmatmul.f32.gmra.mxu0 %v196
    %v198 = vpop.f32.mrf.mxu0
    %v199 = vadd.f32 %v164, %v198
    %200 = vdwg.mxu0
    %201 = vmatpush.msra.mxu0 0.0
    %202 = vmatpush.msra.mxu0 0.0
    %203 = vmatpush.msra.mxu0 0.0
    %204 = vmatpush.msra.mxu0 0.0
    %205 = vmatpush.msra.mxu0 0.0
    %206 = vmatpush.msra.mxu0 0.0
    %207 = vmatpush.msra.mxu0 0.0
    %208 = vmatpush.msra.mxu0 0.0
    %209 = vmatpush.msra.mxu0 0.0
    %210 = vmatpush.msra.mxu0 0.0
    %211 = vmatpush.msra.mxu0 0.0
    %212 = vmatpush.msra.mxu0 0.0
    %v213 = vand.u32 %v76, 4294901760
    %214 = vmatpush.msra.mxu0 %v213
    %v215 = vand.u32 %v75, 4294901760
    %216 = vmatpush.msra.mxu0 %v215
    %v217 = vand.u32 %v74, 4294901760
    %218 = vmatpush.msra.mxu0 %v217
    %v219 = vand.u32 %v73, 4294901760
    %220 = vmatpush.msra.mxu0 %v219
    %v221 = vand.u32 %v79, 4294901760
    %v222 = vsub.f32 %v79, %v221
    %v223 = vand.u32 %v222, 4294901760
    %224 = vmatmul.f32.gmra.mxu0 %v223
    %v225 = vpop.f32.mrf.mxu0
    %v226 = vadd.f32 %v194, %v225
    %v227 = vand.u32 %v82, 4294901760
    %v228 = vsub.f32 %v82, %v227
    %v229 = vand.u32 %v228, 4294901760
    %230 = vmatmul.f32.gmra.mxu0 %v229
    %v231 = vpop.f32.mrf.mxu0
    %v232 = vadd.f32 %v199, %v231
    %233 = vdwg.mxu0
    %234 = vmatpush.msra.mxu0 0.0
    %235 = vmatpush.msra.mxu0 0.0
    %236 = vmatpush.msra.mxu0 0.0
    %237 = vmatpush.msra.mxu0 0.0
    %238 = vmatpush.msra.mxu0 0.0
    %239 = vmatpush.msra.mxu0 0.0
    %240 = vmatpush.msra.mxu0 0.0
    %241 = vmatpush.msra.mxu0 0.0
    %242 = vmatpush.msra.mxu0 0.0
    %243 = vmatpush.msra.mxu0 0.0
    %244 = vmatpush.msra.mxu0 0.0
    %245 = vmatpush.msra.mxu0 0.0
    %v246 = vand.u32 %v76, 4294901760
    %v247 = vsub.f32 %v76, %v246
    %v248 = vand.u32 %v247, 4294901760
    %249 = vmatpush.msra.mxu0 %v248
    %v250 = vand.u32 %v75, 4294901760
    %v251 = vsub.f32 %v75, %v250
    %v252 = vand.u32 %v251, 4294901760
    %253 = vmatpush.msra.mxu0 %v252
    %v254 = vand.u32 %v74, 4294901760
    %v255 = vsub.f32 %v74, %v254
    %v256 = vand.u32 %v255, 4294901760
    %257 = vmatpush.msra.mxu0 %v256
    %v258 = vand.u32 %v73, 4294901760
    %v259 = vsub.f32 %v73, %v258
    %v260 = vand.u32 %v259, 4294901760
    %261 = vmatpush.msra.mxu0 %v260
    %v262 = vand.u32 %v79, 4294901760
    %263 = vmatmul.f32.gmra.mxu0 %v262
    %v264 = vpop.f32.mrf.mxu0
    %v265 = vadd.f32 %v226, %v264
    %v266 = vand.u32 %v82, 4294901760
    %267 = vmatmul.f32.gmra.mxu0 %v266
    %v268 = vpop.f32.mrf.mxu0
    %v269 = vadd.f32 %v232, %v268
    %270 = vdwg.mxu0
    %271 = vmatpush.msra.mxu0 0.0
    %272 = vmatpush.msra.mxu0 0.0
    %273 = vmatpush.msra.mxu0 0.0
    %274 = vmatpush.msra.mxu0 0.0
    %275 = vmatpush.msra.mxu0 0.0
    %276 = vmatpush.msra.mxu0 0.0
    %277 = vmatpush.msra.mxu0 0.0
    %278 = vmatpush.msra.mxu0 0.0
    %279 = vmatpush.msra.mxu0 0.0
    %280 = vmatpush.msra.mxu0 0.0
    %281 = vmatpush.msra.mxu0 0.0
    %282 = vmatpush.msra.mxu0 0.0
    %v283 = vand.u32 %v76, 4294901760
    %284 = vmatpush.msra.mxu0 %v283
    %v285 = vand.u32 %v75, 4294901760
    %286 = vmatpush.msra.mxu0 %v285
    %v287 = vand.u32 %v74, 4294901760
    %288 = vmatpush.msra.mxu0 %v287
    %v289 = vand.u32 %v73, 4294901760
    %290 = vmatpush.msra.mxu0 %v289
    %v291 = vand.u32 %v79, 4294901760
    %292 = vmatmul.f32.gmra.mxu0 %v291
    %v293 = vpop.f32.mrf.mxu0
    %v294 = vadd.f32 %v265, %v293
    %v295 = vand.u32 %v82, 4294901760
    %296 = vmatmul.f32.gmra.mxu0 %v295
    %v297 = vpop.f32.mrf.mxu0
    %v298 = vadd.f32 %v269, %v297
    %299 = vdwg.mxu0
    %v300 = vtanh.pop %v294
    %v301 = vtanh.pop %v298
    %v302 = vld [vmem:[#allocation7] sm:$0xff]
    %v303 = vld [vmem:[#allocation7 + $0x8] sm:$0xff]
    %v304 = vld [vmem:[#allocation2] sm:$0xff]
    %v305 = vld [vmem:[#allocation2 + $0x8] sm:$0xff]
    %v306 = vld [vmem:[#allocation2 + $0x10] sm:$0xff]
    %v307 = vld [vmem:[#allocation2 + $0x18] sm:$0xff]
    %v308 = vld [vmem:[#allocation2 + $0x20] sm:$0xff]
    %v309 = vld [vmem:[#allocation2 + $0x28] sm:$0xff]
    %vm310 = vcmask 392192
    %v312 = vsel %vm310, %v302, 0
    %v315 = vsel %vm310, %v303, 0
    %317 = vmatpush.msra.mxu0 0.0
    %318 = vmatpush.msra.mxu0 0.0
    %319 = vmatpush.msra.mxu0 0.0
    %320 = vmatpush.msra.mxu0 0.0
    %321 = vmatpush.msra.mxu0 0.0
    %322 = vmatpush.msra.mxu0 0.0
    %323 = vmatpush.msra.mxu0 0.0
    %324 = vmatpush.msra.mxu0 0.0
    %325 = vmatpush.msra.mxu0 0.0
    %326 = vmatpush.msra.mxu0 0.0
    %v327 = vand.u32 %v309, 4294901760
    %328 = vmatpush.msra.mxu0 %v327
    %v329 = vand.u32 %v308, 4294901760
    %330 = vmatpush.msra.mxu0 %v329
    %v331 = vand.u32 %v307, 4294901760
    %332 = vmatpush.msra.mxu0 %v331
    %v333 = vand.u32 %v306, 4294901760
    %334 = vmatpush.msra.mxu0 %v333
    %v335 = vand.u32 %v305, 4294901760
    %336 = vmatpush.msra.mxu0 %v335
    %v337 = vand.u32 %v304, 4294901760
    %338 = vmatpush.msra.mxu0 %v337
    %v339 = vand.u32 %v312, 4294901760
    %v340 = vsub.f32 %v312, %v339
    %v341 = vand.u32 %v340, 4294901760
    %v342 = vsub.f32 %v340, %v341
    %v343 = vand.u32 %v342, 4294901760
    %344 = vmatmul.f32.gmra.mxu0 %v343
    %v345 = vpop.f32.mrf.mxu0
    %v346 = vadd.f32 0.0, %v345
    %v347 = vand.u32 %v315, 4294901760
    %v348 = vsub.f32 %v315, %v347
    %v349 = vand.u32 %v348, 4294901760
    %v350 = vsub.f32 %v348, %v349
    %v351 = vand.u32 %v350, 4294901760
    %352 = vmatmul.f32.gmra.mxu0 %v351
    %v353 = vpop.f32.mrf.mxu0
    %v354 = vadd.f32 0.0, %v353
    %355 = vdwg.mxu0
    %356 = vmatpush.msra.mxu0 0.0
    %357 = vmatpush.msra.mxu0 0.0
    %358 = vmatpush.msra.mxu0 0.0
    %359 = vmatpush.msra.mxu0 0.0
    %360 = vmatpush.msra.mxu0 0.0
    %361 = vmatpush.msra.mxu0 0.0
    %362 = vmatpush.msra.mxu0 0.0
    %363 = vmatpush.msra.mxu0 0.0
    %364 = vmatpush.msra.mxu0 0.0
    %365 = vmatpush.msra.mxu0 0.0
    %v366 = vand.u32 %v309, 4294901760
    %v367 = vsub.f32 %v309, %v366
    %v368 = vand.u32 %v367, 4294901760
    %v369 = vsub.f32 %v367, %v368
    %v370 = vand.u32 %v369, 4294901760
    %371 = vmatpush.msra.mxu0 %v370
    %v372 = vand.u32 %v308, 4294901760
    %v373 = vsub.f32 %v308, %v372
    %v374 = vand.u32 %v373, 4294901760
    %v375 = vsub.f32 %v373, %v374
    %v376 = vand.u32 %v375, 4294901760
    %377 = vmatpush.msra.mxu0 %v376
    %v378 = vand.u32 %v307, 4294901760
    %v379 = vsub.f32 %v307, %v378
    %v380 = vand.u32 %v379, 4294901760
    %v381 = vsub.f32 %v379, %v380
    %v382 = vand.u32 %v381, 4294901760
    %383 = vmatpush.msra.mxu0 %v382
    %v384 = vand.u32 %v306, 4294901760
    %v385 = vsub.f32 %v306, %v384
    %v386 = vand.u32 %v385, 4294901760
    %v387 = vsub.f32 %v385, %v386
    %v388 = vand.u32 %v387, 4294901760
    %389 = vmatpush.msra.mxu0 %v388
    %v390 = vand.u32 %v305, 4294901760
    %v391 = vsub.f32 %v305, %v390
    %v392 = vand.u32 %v391, 4294901760
    %v393 = vsub.f32 %v391, %v392
    %v394 = vand.u32 %v393, 4294901760
    %395 = vmatpush.msra.mxu0 %v394
    %v396 = vand.u32 %v304, 4294901760
    %v397 = vsub.f32 %v304, %v396
    %v398 = vand.u32 %v397, 4294901760
    %v399 = vsub.f32 %v397, %v398
    %v400 = vand.u32 %v399, 4294901760
    %401 = vmatpush.msra.mxu0 %v400
    %v402 = vand.u32 %v312, 4294901760
    %403 = vmatmul.f32.gmra.mxu0 %v402
    %v404 = vpop.f32.mrf.mxu0
    %v405 = vadd.f32 %v346, %v404
    %v406 = vand.u32 %v315, 4294901760
    %407 = vmatmul.f32.gmra.mxu0 %v406
    %v408 = vpop.f32.mrf.mxu0
    %v409 = vadd.f32 %v354, %v408
    %410 = vdwg.mxu0
    %411 = vmatpush.msra.mxu0 0.0
    %412 = vmatpush.msra.mxu0 0.0
    %413 = vmatpush.msra.mxu0 0.0
    %414 = vmatpush.msra.mxu0 0.0
    %415 = vmatpush.msra.mxu0 0.0
    %416 = vmatpush.msra.mxu0 0.0
    %417 = vmatpush.msra.mxu0 0.0
    %418 = vmatpush.msra.mxu0 0.0
    %419 = vmatpush.msra.mxu0 0.0
    %420 = vmatpush.msra.mxu0 0.0
    %v421 = vand.u32 %v309, 4294901760
    %v422 = vsub.f32 %v309, %v421
    %423 = vmatpush.msra.mxu0 %v422
    %v424 = vand.u32 %v308, 4294901760
    %v425 = vsub.f32 %v308, %v424
    %426 = vmatpush.msra.mxu0 %v425
    %v427 = vand.u32 %v307, 4294901760
    %v428 = vsub.f32 %v307, %v427
    %429 = vmatpush.msra.mxu0 %v428
    %v430 = vand.u32 %v306, 4294901760
    %v431 = vsub.f32 %v306, %v430
    %432 = vmatpush.msra.mxu0 %v431
    %v433 = vand.u32 %v305, 4294901760
    %v434 = vsub.f32 %v305, %v433
    %435 = vmatpush.msra.mxu0 %v434
    %v436 = vand.u32 %v304, 4294901760
    %v437 = vsub.f32 %v304, %v436
    %438 = vmatpush.msra.mxu0 %v437
    %v439 = vand.u32 %v312, 4294901760
    %v440 = vsub.f32 %v312, %v439
    %441 = vmatmul.f32.gmra.mxu0 %v440
    %v442 = vpop.f32.mrf.mxu0
    %v443 = vadd.f32 %v405, %v442
    %v444 = vand.u32 %v315, 4294901760
    %v445 = vsub.f32 %v315, %v444
    %446 = vmatmul.f32.gmra.mxu0 %v445
    %v447 = vpop.f32.mrf.mxu0
    %v448 = vadd.f32 %v409, %v447
    %449 = vdwg.mxu0
    %450 = vmatpush.msra.mxu0 0.0
    %451 = vmatpush.msra.mxu0 0.0
    %452 = vmatpush.msra.mxu0 0.0
    %453 = vmatpush.msra.mxu0 0.0
    %454 = vmatpush.msra.mxu0 0.0
    %455 = vmatpush.msra.mxu0 0.0
    %456 = vmatpush.msra.mxu0 0.0
    %457 = vmatpush.msra.mxu0 0.0
    %458 = vmatpush.msra.mxu0 0.0
    %459 = vmatpush.msra.mxu0 0.0
    %v460 = vand.u32 %v309, 4294901760
    %461 = vmatpush.msra.mxu0 %v460
    %v462 = vand.u32 %v308, 4294901760
    %463 = vmatpush.msra.mxu0 %v462
    %v464 = vand.u32 %v307, 4294901760
    %465 = vmatpush.msra.mxu0 %v464
    %v466 = vand.u32 %v306, 4294901760
    %467 = vmatpush.msra.mxu0 %v466
    %v468 = vand.u32 %v305, 4294901760
    %469 = vmatpush.msra.mxu0 %v468
    %v470 = vand.u32 %v304, 4294901760
    %471 = vmatpush.msra.mxu0 %v470
    %v472 = vand.u32 %v312, 4294901760
    %v473 = vsub.f32 %v312, %v472
    %v474 = vand.u32 %v473, 4294901760
    %475 = vmatmul.f32.gmra.mxu0 %v474
    %v476 = vpop.f32.mrf.mxu0
    %v477 = vadd.f32 %v443, %v476
    %v478 = vand.u32 %v315, 4294901760
    %v479 = vsub.f32 %v315, %v478
    %v480 = vand.u32 %v479, 4294901760
    %481 = vmatmul.f32.gmra.mxu0 %v480
    %v482 = vpop.f32.mrf.mxu0
    %v483 = vadd.f32 %v448, %v482
    %484 = vdwg.mxu0
    %485 = vmatpush.msra.mxu0 0.0
    %486 = vmatpush.msra.mxu0 0.0
    %487 = vmatpush.msra.mxu0 0.0
    %488 = vmatpush.msra.mxu0 0.0
    %489 = vmatpush.msra.mxu0 0.0
    %490 = vmatpush.msra.mxu0 0.0
    %491 = vmatpush.msra.mxu0 0.0
    %492 = vmatpush.msra.mxu0 0.0
    %493 = vmatpush.msra.mxu0 0.0
    %494 = vmatpush.msra.mxu0 0.0
    %v495 = vand.u32 %v309, 4294901760
    %v496 = vsub.f32 %v309, %v495
    %v497 = vand.u32 %v496, 4294901760
    %498 = vmatpush.msra.mxu0 %v497
    %v499 = vand.u32 %v308, 4294901760
    %v500 = vsub.f32 %v308, %v499
    %v501 = vand.u32 %v500, 4294901760
    %502 = vmatpush.msra.mxu0 %v501
    %v503 = vand.u32 %v307, 4294901760
    %v504 = vsub.f32 %v307, %v503
    %v505 = vand.u32 %v504, 4294901760
    %506 = vmatpush.msra.mxu0 %v505
    %v507 = vand.u32 %v306, 4294901760
    %v508 = vsub.f32 %v306, %v507
    %v509 = vand.u32 %v508, 4294901760
    %510 = vmatpush.msra.mxu0 %v509
    %v511 = vand.u32 %v305, 4294901760
    %v512 = vsub.f32 %v305, %v511
    %v513 = vand.u32 %v512, 4294901760
    %514 = vmatpush.msra.mxu0 %v513
    %v515 = vand.u32 %v304, 4294901760
    %v516 = vsub.f32 %v304, %v515
    %v517 = vand.u32 %v516, 4294901760
    %518 = vmatpush.msra.mxu0 %v517
    %v519 = vand.u32 %v312, 4294901760
    %520 = vmatmul.f32.gmra.mxu0 %v519
    %v521 = vpop.f32.mrf.mxu0
    %v522 = vadd.f32 %v477, %v521
    %v523 = vand.u32 %v315, 4294901760
    %524 = vmatmul.f32.gmra.mxu0 %v523
    %v525 = vpop.f32.mrf.mxu0
    %v526 = vadd.f32 %v483, %v525
    %527 = vdwg.mxu0
    %528 = vmatpush.msra.mxu0 0.0
    %529 = vmatpush.msra.mxu0 0.0
    %530 = vmatpush.msra.mxu0 0.0
    %531 = vmatpush.msra.mxu0 0.0
    %532 = vmatpush.msra.mxu0 0.0
    %533 = vmatpush.msra.mxu0 0.0
    %534 = vmatpush.msra.mxu0 0.0
    %535 = vmatpush.msra.mxu0 0.0
    %536 = vmatpush.msra.mxu0 0.0
    %537 = vmatpush.msra.mxu0 0.0
    %v538 = vand.u32 %v309, 4294901760
    %539 = vmatpush.msra.mxu0 %v538
    %v540 = vand.u32 %v308, 4294901760
    %541 = vmatpush.msra.mxu0 %v540
    %v542 = vand.u32 %v307, 4294901760
    %543 = vmatpush.msra.mxu0 %v542
    %v544 = vand.u32 %v306, 4294901760
    %545 = vmatpush.msra.mxu0 %v544
    %v546 = vand.u32 %v305, 4294901760
    %547 = vmatpush.msra.mxu0 %v546
    %v548 = vand.u32 %v304, 4294901760
    %549 = vmatpush.msra.mxu0 %v548
    %v550 = vand.u32 %v312, 4294901760
    %551 = vmatmul.f32.gmra.mxu0 %v550
    %v552 = vpop.f32.mrf.mxu0
    %v553 = vadd.f32 %v522, %v552
    %v554 = vand.u32 %v315, 4294901760
    %555 = vmatmul.f32.gmra.mxu0 %v554
    %v556 = vpop.f32.mrf.mxu0
    %v557 = vadd.f32 %v526, %v556
    %558 = vdwg.mxu0
    %v559 = vtanh.pop %v553
    %v560 = vtanh.pop %v557
    %v561 = vld [vmem:[%s4] sm:$0xff]
    %v562 = vld [vmem:[%s4 + $0x8] sm:$0xff]
    %564 = vset.pattern.permute.xlu0 0
    %565 = vperm.xlu0 %564, %v561
    %v566 = vpop.permute.xlu0 %565
    %569 = vset.pattern.permute.xlu0 0
    %570 = vperm.xlu0 %569, %v562
    %v571 = vpop.permute.xlu0 %570
    %v573 = vmul.f32 %v300, %v566
    %v574 = vmul.f32 %v301, %v571
    %v575 = vld [vmem:[%s5] sm:$0xff]
    %v576 = vld [vmem:[%s5 + $0x8] sm:$0xff]
    %578 = vset.pattern.permute.xlu0 0
    %579 = vperm.xlu0 %578, %v575
    %v580 = vpop.permute.xlu0 %579
    %583 = vset.pattern.permute.xlu0 0
    %584 = vperm.xlu0 %583, %v576
    %v585 = vpop.permute.xlu0 %584
    %v587 = vmul.f32 %v559, %v580
    %v588 = vmul.f32 %v560, %v585
    %v589 = vadd.f32 %v573, %v587
    %v590 = vadd.f32 %v574, %v588
    %v591 = vadd.f32 %v589, %v590
    %v592 = vrot.slane %v591, 4
    %v593 = vadd.f32 %v591, %v592
    %v594 = vrot.slane %v593, 2
    %v595 = vadd.f32 %v593, %v594
    %v596 = vrot.slane %v595, 1
    %v597 = vadd.f32 %v595, %v596
    %v598 = vxor.u32 %v597, 2147483648
    %v599 = vmul.f32 %v598, 1.442695
    %v600 = vpow.pop %v599
    %v601 = vadd.f32 %v600, 1.0
    %v602 = vrcp.pop %v601
    %v603 = vmul.f32 %v601, %v602
    %v604 = vsub.f32 1.0, %v603
    %v605 = vmul.f32 %v602, %v604
    %v606 = vadd.f32 %v602, %v605
    %vm607 = vweird.f32 %v601
    %vm608 = vweird.f32 %v602
    %vm609 = vmor %vm607, %vm608
    %v610 = vsel %vm609, %v602, %v606
    %v611 = vand.u32 2147483647, %v601
    %vm612 = vcmp.eq.f32.partialorder %v611, 8.507059e+37
    %v613 = vand.u32 %v601, 2147483648
    %v614 = vor.u32 1.1754944e-38, %v613
    %v615 = vsel %vm612, %v614, %v610
    %v616 = vmul.f32 1.0, %v615
    %v617 = vsub.f32 %v300, %v559
    %v618 = vsub.f32 %v301, %v560
    %v619 = vmul.f32 %v616, %v617
    %v620 = vmul.f32 %v616, %v618
    %v621 = vadd.f32 %v559, %v619
    %v622 = vadd.f32 %v560, %v620
    %623 = vst [vmem:[#allocation8] sm:$0xff] %v621
    %624 = vst [vmem:[#allocation8 + $0x8] sm:$0xff] %v622
    // Predicated region
    $region38: #{tpu_custom_call.1} parent=1 // pred_check
      _
    $region39: #{tpu_custom_call.1} parent=1 // pred_check_branch
      %626 = sbr.rel (0) target = $region41
    $region40: #{tpu_custom_call.1} parent=1 // pred_region
      %628 = vsyncadd [#allocation4], 0
      %s629 = sshll.u32 [#allocation8], 4
      %s630 = int_to_ptr.vmem [resolvable:$true] %s629
      %s631 = sshll.u32 %s6, 4
      %s632 = int_to_ptr.hbm [resolvable:$true] %s631
      %637 = dma.vmem_to_hbm [thread:$0]  %s630, 256, %s632, [#allocation4], 128, 128, 8
    $region41: #{tpu_custom_call.1} parent=1 // pred_fallthru
      _
    // Predicated region
    $region42: #{tpu_custom_call.1} parent=1 // pred_check
      _
    $region43: #{tpu_custom_call.1} parent=1 // pred_check_branch
      %639 = sbr.rel (0) target = $region45
    $region44: #{tpu_custom_call.1} parent=1 // pred_region
      %641 = dma.done [#allocation4], 256
    $region45: #{tpu_custom_call.1} parent=1 // pred_fallthru
      _
    %642 = vsyncpa [#allocation3], 1
    %643 = vsyncpa [#allocation6], 1
    %644 = vsyncpa [#allocation4], 1

</llo_original>
